<compile_context>
chip_gen: v7x
topology: tpu7x:2x2x1
jax: 0.10.0
libtpu: 0.0.40
codegen_flags: <defaults>
</compile_context>

<pallas_src>
import functools
import math

import jax
import jax.numpy as jnp
from jax import lax
from jax.experimental import pallas as pl
from jax.experimental.pallas import tpu as pltpu


def _embed_kernel(x_ref, w1_ref, b1_ref, w2_ref, b2_ref, o_ref, acc_ref, *,
                  compute_dtype):
    """Grid = (batch_blocks, k_blocks); k (dim_in reduction) is the inner axis."""
    k = pl.program_id(1)

    @pl.when(k == 0)
    def _():
        acc_ref[...] = jnp.zeros_like(acc_ref)

    # Partial product of Linear 1 over this K slab (MXU, f32 accumulation).
    # Weights arrive already in compute_dtype (cast once in the wrapper);
    # only the streamed x tile is cast here (no-op if x is already bf16).
    acc_ref[...] += jnp.dot(x_ref[...].astype(compute_dtype), w1_ref[...],
                            preferred_element_type=jnp.float32)

    @pl.when(k == pl.num_programs(1) - 1)
    def _():
        # Bias + ReLU in f32, second Linear on the MXU, then L2 normalize.
        h = jnp.maximum(acc_ref[...] + b1_ref[...], 0.0)
        y = jnp.dot(h.astype(compute_dtype), w2_ref[...],
                    preferred_element_type=jnp.float32) + b2_ref[...]
        # rsqrt lands on the EUP slot; the scale is a cheap VPU multiply.
        # Note: like the PyTorch module, an all-zero row yields NaN.
        inv_norm = lax.rsqrt(jnp.sum(y * y, axis=1, keepdims=True))
        o_ref[...] = (y * inv_norm).astype(o_ref.dtype)


def _vmem_budget_bytes():
    """Per-generation scoped-VMEM ceiling: ~7/8 of physical VMEM per core
    (~56 MiB on v7x, ~112 MiB on v5e/v6e), leaving headroom for Mosaic
    internal scratch / pipeline state."""
    try:
        cap = pltpu.get_tpu_info().vmem_capacity_bytes
    except Exception:
        cap = 64 * 1024 * 1024  # conservative: v7x per-TensorCore VMEM
    return int(cap * 7 // 8)


def _vmem_estimate(tb, tk, d_in, d_out, w_bytes, x_bytes, single_buffer_weights):
    """Rough VMEM footprint for one grid step (with headroom)."""
    wbuf = 1 if single_buffer_weights else 2
    w1_bufs = wbuf if tk == d_in else 2          # streamed w1 is double-buffered
    est = (w1_bufs * tk * d_out * w_bytes        # w1 slab(s)
           + wbuf * (d_out * d_out * w_bytes + 2 * d_out * 4)  # w2 + biases
           + 2 * tb * tk * x_bytes               # pipelined x tiles
           + 2 * tb * d_out * 4                  # pipelined out tiles
           + tb * d_out * 4                      # f32 accumulator scratch
           + 4 * tb * d_out * 4)                 # epilogue temporaries
    return int(1.4 * est)                        # headroom


def _choose_batch_tile(B, block_b):
    """Pick (tb, padded_B). Prefer a multiple-of-8 tile that divides B (no pad)
    and gives >= 2 batch blocks so megacore can split the 'parallel' axis."""
    block_b = max(8, (block_b // 8) * 8)
    if B <= block_b:
        if B >= 16 and B % 16 == 0:
            return B // 2, B              # two blocks -> both v7x TensorCores
        return B, B                       # single block == full dim (always legal)
    cand = block_b
    while cand >= 8:
        if B % cand == 0:
            return cand, B
        cand -= 8
    # No clean divisor: pad the batch (extra HBM copy of x).
    # TODO(synk): mask tail rows in-kernel instead of padding to avoid the copy.
    return block_b, pl.cdiv(B, block_b) * block_b


def _choose_k_tile(d_in, d_out, tb, w_bytes, x_bytes, budget, block_k=None):
    """Pick the dim_in slab. d_in (all-resident w1) if it fits the VMEM budget,
    otherwise the largest multiple of 128 dividing d_in that fits."""
    if block_k is not None:
        assert block_k == d_in or (block_k % 128 == 0 and d_in % block_k == 0), (
            "block_k must be dim_in or a multiple of 128 dividing dim_in")
        return block_k
    if _vmem_estimate(tb, d_in, d_in, d_out, w_bytes, x_bytes, True) <= budget:
        return d_in                        # all-resident w1 fast path
    if d_in % 128 != 0:
        # TODO(synk): pad dim_in to a multiple of 128 to enable K tiling here.
        return d_in
    cands = [c for c in range(128, d_in, 128) if d_in % c == 0]
    for c in sorted(cands, reverse=True):
        if _vmem_estimate(tb, c, d_in, d_out, w_bytes, x_bytes, True) <= budget:
            return c
    return cands[0] if cands else d_in


def embed_forward(x, w1, b1, w2, b2, *, block_b=256, block_k=None,
                  compute_dtype=jnp.bfloat16):
    """x: (B, C, H, W) or (B, dim_in). Returns (B, dim_out) float32.

    block_b: batch tile target (256-512 recommended on v6e/v7x, 128-256 on v5e).
    block_k: optional dim_in slab override (multiple of 128 dividing dim_in).
    compute_dtype: matmul operand dtype (f32 accumulation either way).
        bf16 (default) uses the MXU's native rate on v5e/v6e/v7x; pass
        jnp.float32 for a bit-faithful match to the PyTorch module.
    """
    x2d = x.reshape(x.shape[0], -1)
    B, d_in = x2d.shape
    d_out = w1.shape[1]
    assert w1.shape == (d_in, d_out) and w2.shape == (d_out, d_out)

    # Cast weights ONCE here (not per grid step inside the kernel). Biases stay
    # f32 and are added to the f32 accumulator.
    w1c = w1.astype(compute_dtype)
    w2c = w2.astype(compute_dtype)
    b1f = b1.reshape(1, d_out).astype(jnp.float32)
    b2f = b2.reshape(1, d_out).astype(jnp.float32)

    w_bytes = jnp.dtype(compute_dtype).itemsize
    x_bytes = x2d.dtype.itemsize

    budget = _vmem_budget_bytes()
    tb, b_padded = _choose_batch_tile(B, block_b)
    if b_padded != B:
        x2d = jnp.pad(x2d, ((0, b_padded - B), (0, 0)))
    num_b = b_padded // tb

    tk = _choose_k_tile(d_in, d_out, tb, w_bytes, x_bytes, budget, block_k)
    num_k = d_in // tk if d_in % tk == 0 else 1
    if num_k == 1:
        tk = d_in

    kernel = functools.partial(_embed_kernel, compute_dtype=compute_dtype)
    out_shape = jax.ShapeDtypeStruct((b_padded, d_out), jnp.float32)

    def run(single_buffer_weights):
        resident = pl.Buffered(1) if single_buffer_weights else None
        w1_mode = resident if num_k == 1 else None   # streamed w1 double-buffers
        vmem_limit = min(
            max(_vmem_estimate(tb, tk, d_in, d_out, w_bytes, x_bytes,
                               single_buffer_weights),
                32 * 1024 * 1024),
            budget)
        return pl.pallas_call(
            kernel,
            out_shape=out_shape,
            grid=(num_b, num_k),
            in_specs=[
                pl.BlockSpec((tb, tk), lambda i, k: (i, k)),            # x: streamed
                pl.BlockSpec((tk, d_out), lambda i, k: (k, 0),
                             pipeline_mode=w1_mode),                    # w1
                pl.BlockSpec((1, d_out), lambda i, k: (0, 0),
                             pipeline_mode=resident),                   # b1: resident
                pl.BlockSpec((d_out, d_out), lambda i, k: (0, 0),
                             pipeline_mode=resident),                   # w2: resident
                pl.BlockSpec((1, d_out), lambda i, k: (0, 0),
                             pipeline_mode=resident),                   # b2: resident
            ],
            out_specs=pl.BlockSpec((tb, d_out), lambda i, k: (i, 0)),
            scratch_shapes=[pltpu.VMEM((tb, d_out), jnp.float32)],      # f32 acc
            compiler_params=pltpu.CompilerParams(
                dimension_semantics=("parallel", "arbitrary"),
                vmem_limit_bytes=int(vmem_limit),
            ),
        )(x2d, w1c, b1f, w2c, b2f)

    try:
        out = run(single_buffer_weights=True)
    except Exception:
        # Fallback if this JAX/Mosaic build rejects pl.Buffered(1) on
        # constant-index specs (or the tighter VMEM estimate doesn't compile).
        out = run(single_buffer_weights=False)

    return out[:B]


def init_embed_params(key, dim_in, dim_out):
    """Deterministic init mimicking nn.Linear's U(-1/sqrt(fan_in), 1/sqrt(fan_in))."""
    k1, k2, k3, k4 = jax.random.split(key, 4)
    bound1 = 1.0 / math.sqrt(dim_in)
    bound2 = 1.0 / math.sqrt(dim_out)
    # stored pre-transposed: (in, out) so the kernel computes x @ W (== torch x @ W^T)
    w1 = jax.random.uniform(k1, (dim_in, dim_out), jnp.float32, -bound1, bound1)
    b1 = jax.random.uniform(k2, (1, dim_out), jnp.float32, -bound1, bound1)
    w2 = jax.random.uniform(k3, (dim_out, dim_out), jnp.float32, -bound2, bound2)
    b2 = jax.random.uniform(k4, (1, dim_out), jnp.float32, -bound2, bound2)
    return w1, b1, w2, b2


def embed_ref(x, w1, b1, w2, b2):
    """Pure-JAX reference matching the PyTorch module exactly."""
    x2d = x.reshape(x.shape[0], -1)
    h = jnp.maximum(x2d @ w1 + b1, 0.0)
    y = h @ w2 + b2
    norm = jnp.sqrt(jnp.sum(y * y, axis=1, keepdims=True))
    return y / norm


if __name__ == "__main__":
    key = jax.random.PRNGKey(0)
    kx, kp, kx2, kp2 = jax.random.split(key, 4)

    # Case 1: NCHW feature map flattened to dim_in = C*H*W = 64, dim_out = 128.
    B, C, H, W = 16, 4, 4, 4
    dim_in, dim_out = C * H * W, 128
    x = jax.random.normal(kx, (B, C, H, W), jnp.float32)
    w1, b1, w2, b2 = init_embed_params(kp, dim_in, dim_out)
    ref = embed_ref(x, w1, b1, w2, b2)

    # f32-operand path (bit-faithful); block_b=8 -> 2 batch blocks so the
    # batch-tiled / resident-weight path is exercised.
    out_f32 = jax.block_until_ready(
        embed_forward(x, w1, b1, w2, b2, block_b=8, compute_dtype=jnp.float32))
    assert out_f32.shape == (B, dim_out)
    assert jnp.allclose(out_f32, ref, atol=2e-5, rtol=2e-5)
    assert jnp.allclose(jnp.linalg.norm(out_f32, axis=1), 1.0, atol=2e-5)

    # Default bf16-operand path (f32 accumulation): looser tolerance expected.
    out_bf16 = jax.block_until_ready(embed_forward(x, w1, b1, w2, b2, block_b=8))
    assert jnp.allclose(out_bf16, ref, atol=5e-2, rtol=5e-2)

    # Case 2: exercise the K-tiled (dim_in split) reduction path explicitly.
    dim_in2 = 256
    x2 = jax.random.normal(kx2, (B, dim_in2), jnp.float32)
    w1b, b1b, w2b, b2b = init_embed_params(kp2, dim_in2, dim_out)
    ref2 = embed_ref(x2, w1b, b1b, w2b, b2b)
    out2 = jax.block_until_ready(
        embed_forward(x2, w1b, b1b, w2b, b2b, block_b=8, block_k=128,
                      compute_dtype=jnp.float32))
    assert out2.shape == (B, dim_out)
    assert jnp.allclose(out2, ref2, atol=5e-4, rtol=5e-4)

    print("KERNEL_OK")
</pallas_src>

<mosaic_0001>
module attributes {stable_mosaic.version = 11 : i64} {
  func.func @_embed_kernel(%arg0: i32, %arg1: i32, %arg2: memref<8x64xf32, #tpu.memory_space<vmem>>, %arg3: memref<64x128xf32, #tpu.memory_space<vmem>>, %arg4: memref<1x128xf32, #tpu.memory_space<vmem>>, %arg5: memref<128x128xf32, #tpu.memory_space<vmem>>, %arg6: memref<1x128xf32, #tpu.memory_space<vmem>>, %arg7: memref<8x128xf32, #tpu.memory_space<vmem>>, %arg8: memref<8x128xf32, #tpu.memory_space<vmem>>) attributes {dimension_semantics = [#tpu.dimension_semantics<parallel>, #tpu.dimension_semantics<arbitrary>], iteration_bounds = array<i64: 2, 1>, scalar_prefetch = 0 : i64, scratch_operands = 1 : i64, tpu.core_type = #tpu.core_type<tc>, window_params = [{transform_indices = @transform_0, window_bounds = array<i64: 8, 64>}, {pipeline_mode = #tpu.pipeline_mode<synchronous>, transform_indices = @transform_1, window_bounds = array<i64: 64, 128>}, {pipeline_mode = #tpu.pipeline_mode<synchronous>, transform_indices = @transform_2, window_bounds = array<i64: 1, 128>}, {pipeline_mode = #tpu.pipeline_mode<synchronous>, transform_indices = @transform_3, window_bounds = array<i64: 128, 128>}, {pipeline_mode = #tpu.pipeline_mode<synchronous>, transform_indices = @transform_4, window_bounds = array<i64: 1, 128>}, {transform_indices = @transform_5, window_bounds = array<i64: 8, 128>}]} {
    %c0_i32 = arith.constant 0 : i32
    %0 = arith.cmpi eq, %arg1, %c0_i32 : i32
    %1 = arith.extui %0 : i1 to i32
    %c0_i32_0 = arith.constant 0 : i32
    %2 = arith.cmpi ne, %1, %c0_i32_0 : i32
    scf.if %2 {
      %cst_10 = arith.constant 0.000000e+00 : f32
      %12 = vector.broadcast %cst_10 : f32 to vector<8x128xf32>
      %c0_11 = arith.constant 0 : index
      %c0_12 = arith.constant 0 : index
      %13 = vector.load %arg8[%c0_11, %c0_12] : memref<8x128xf32, #tpu.memory_space<vmem>>, vector<8x128xf32>
      tpu.vector_store %arg8[%c0_11, %c0_12], %12 {strides = array<i32>} : memref<8x128xf32, #tpu.memory_space<vmem>>, vector<8x128xf32>,
    } else {
    }
    %c0 = arith.constant 0 : index
    %c0_1 = arith.constant 0 : index
    %3 = vector.load %arg8[%c0, %c0_1] : memref<8x128xf32, #tpu.memory_space<vmem>>, vector<8x128xf32>
    %c0_2 = arith.constant 0 : index
    %c0_3 = arith.constant 0 : index
    %4 = vector.load %arg2[%c0_2, %c0_3] : memref<8x64xf32, #tpu.memory_space<vmem>>, vector<8x64xf32>
    %c0_4 = arith.constant 0 : index
    %c0_5 = arith.constant 0 : index
    %5 = vector.load %arg3[%c0_4, %c0_5] : memref<64x128xf32, #tpu.memory_space<vmem>>, vector<64x128xf32>
    %cst = arith.constant dense<0.000000e+00> : vector<8x128xf32>
    %6 = tpu.matmul %4, %5, %cst {dimension_numbers = #tpu.dot_dimension_numbers<[1], [0], [0], [1], [0, 0, 1, 1], [], []>} : vector<8x64xf32>, vector<64x128xf32>, vector<8x128xf32> -> vector<8x128xf32>
    %7 = arith.addf %3, %6 : vector<8x128xf32>
    %c0_6 = arith.constant 0 : index
    %c0_7 = arith.constant 0 : index
    %8 = vector.load %arg8[%c0_6, %c0_7] : memref<8x128xf32, #tpu.memory_space<vmem>>, vector<8x128xf32>
    tpu.vector_store %arg8[%c0_6, %c0_7], %7 {strides = array<i32>} : memref<8x128xf32, #tpu.memory_space<vmem>>, vector<8x128xf32>,
    %c0_i32_8 = arith.constant 0 : i32
    %9 = arith.cmpi eq, %arg1, %c0_i32_8 : i32
    %10 = arith.extui %9 : i1 to i32
    %c0_i32_9 = arith.constant 0 : i32
    %11 = arith.cmpi ne, %10, %c0_i32_9 : i32
    scf.if %11 {
      %c0_10 = arith.constant 0 : index
      %c0_11 = arith.constant 0 : index
      %12 = vector.load %arg8[%c0_10, %c0_11] : memref<8x128xf32, #tpu.memory_space<vmem>>, vector<8x128xf32>
      %c0_12 = arith.constant 0 : index
      %c0_13 = arith.constant 0 : index
      %13 = vector.load %arg4[%c0_12, %c0_13] : memref<1x128xf32, #tpu.memory_space<vmem>>, vector<1x128xf32>
      %14 = vector.broadcast %13 : vector<1x128xf32> to vector<8x128xf32>
      %15 = arith.addf %12, %14 : vector<8x128xf32>
      %cst_14 = arith.constant 0.000000e+00 : f32
      %16 = vector.broadcast %cst_14 : f32 to vector<8x128xf32>
      %17 = arith.maximumf %15, %16 : vector<8x128xf32>
      %c0_15 = arith.constant 0 : index
      %c0_16 = arith.constant 0 : index
      %18 = vector.load %arg5[%c0_15, %c0_16] : memref<128x128xf32, #tpu.memory_space<vmem>>, vector<128x128xf32>
      %cst_17 = arith.constant dense<0.000000e+00> : vector<8x128xf32>
      %19 = tpu.matmul %17, %18, %cst_17 {dimension_numbers = #tpu.dot_dimension_numbers<[1], [0], [0], [1], [0, 0, 1, 1], [], []>} : vector<8x128xf32>, vector<128x128xf32>, vector<8x128xf32> -> vector<8x128xf32>
      %c0_18 = arith.constant 0 : index
      %c0_19 = arith.constant 0 : index
      %20 = vector.load %arg6[%c0_18, %c0_19] : memref<1x128xf32, #tpu.memory_space<vmem>>, vector<1x128xf32>
      %21 = vector.broadcast %20 : vector<1x128xf32> to vector<8x128xf32>
      %22 = arith.addf %19, %21 : vector<8x128xf32>
      %23 = arith.mulf %22, %22 : vector<8x128xf32>
      %cst_20 = arith.constant dense<0.000000e+00> : vector<8xf32>
      %24 = vector.multi_reduction <add>, %23, %cst_20 [1] : vector<8x128xf32> to vector<8xf32>
      %25 = vector.shape_cast %24 : vector<8xf32> to vector<8x1xf32>
      %26 = math.rsqrt %25 : vector<8x1xf32>
      %27 = vector.broadcast %26 : vector<8x1xf32> to vector<8x128xf32>
      %28 = arith.mulf %22, %27 : vector<8x128xf32>
      %c0_21 = arith.constant 0 : index
      %c0_22 = arith.constant 0 : index
      %29 = vector.load %arg7[%c0_21, %c0_22] : memref<8x128xf32, #tpu.memory_space<vmem>>, vector<8x128xf32>
      tpu.vector_store %arg7[%c0_21, %c0_22], %28 {strides = array<i32>} : memref<8x128xf32, #tpu.memory_space<vmem>>, vector<8x128xf32>,
    } else {
    }
    return
  }
  func.func @transform_0(%arg0: i32, %arg1: i32) -> (i32, i32) {
    %c0_i32 = arith.constant 0 : i32
    return %arg0, %arg1 : i32, i32
  }
  func.func @transform_1(%arg0: i32, %arg1: i32) -> (i32, i32) {
    %c0_i32 = arith.constant 0 : i32
    %c0_i32_0 = arith.constant 0 : i32
    return %arg1, %c0_i32 : i32, i32
  }
  func.func @transform_2(%arg0: i32, %arg1: i32) -> (i32, i32) {
    %c0_i32 = arith.constant 0 : i32
    %c0_i32_0 = arith.constant 0 : i32
    %c0_i32_1 = arith.constant 0 : i32
    return %c0_i32, %c0_i32_0 : i32, i32
  }
  func.func @transform_3(%arg0: i32, %arg1: i32) -> (i32, i32) {
    %c0_i32 = arith.constant 0 : i32
    %c0_i32_0 = arith.constant 0 : i32
    %c0_i32_1 = arith.constant 0 : i32
    return %c0_i32, %c0_i32_0 : i32, i32
  }
  func.func @transform_4(%arg0: i32, %arg1: i32) -> (i32, i32) {
    %c0_i32 = arith.constant 0 : i32
    %c0_i32_0 = arith.constant 0 : i32
    %c0_i32_1 = arith.constant 0 : i32
    return %c0_i32, %c0_i32_0 : i32, i32
  }
  func.func @transform_5(%arg0: i32, %arg1: i32) -> (i32, i32) {
    %c0_i32 = arith.constant 0 : i32
    %c0_i32_0 = arith.constant 0 : i32
    return %arg0, %c0_i32 : i32, i32
  }
}

module attributes {stable_mosaic.version = 11 : i64} {
  func.func @_embed_kernel(%arg0: i32, %arg1: i32, %arg2: memref<8x64xf32, #tpu.memory_space<vmem>>, %arg3: memref<64x128xf32, #tpu.memory_space<vmem>>, %arg4: memref<1x128xf32, #tpu.memory_space<vmem>>, %arg5: memref<128x128xf32, #tpu.memory_space<vmem>>, %arg6: memref<1x128xf32, #tpu.memory_space<vmem>>, %arg7: memref<8x128xf32, #tpu.memory_space<vmem>>, %arg8: memref<8x128xf32, #tpu.memory_space<vmem>>) attributes {dimension_semantics = [#tpu.dimension_semantics<parallel>, #tpu.dimension_semantics<arbitrary>], iteration_bounds = array<i64: 2, 1>, scalar_prefetch = 0 : i64, scratch_operands = 1 : i64, tpu.core_type = #tpu.core_type<tc>, window_params = [{transform_indices = @transform_0, window_bounds = array<i64: 8, 64>}, {transform_indices = @transform_1, window_bounds = array<i64: 64, 128>}, {pipeline_mode = #tpu.pipeline_mode<synchronous>, transform_indices = @transform_2, window_bounds = array<i64: 1, 128>}, {pipeline_mode = #tpu.pipeline_mode<synchronous>, transform_indices = @transform_3, window_bounds = array<i64: 128, 128>}, {pipeline_mode = #tpu.pipeline_mode<synchronous>, transform_indices = @transform_4, window_bounds = array<i64: 1, 128>}, {transform_indices = @transform_5, window_bounds = array<i64: 8, 128>}]} {
    %c0_i32 = arith.constant 0 : i32
    %0 = arith.cmpi eq, %arg1, %c0_i32 : i32
    %1 = arith.extui %0 : i1 to i32
    %c0_i32_0 = arith.constant 0 : i32
    %2 = arith.cmpi ne, %1, %c0_i32_0 : i32
    scf.if %2 {
      %cst_10 = arith.constant 0.000000e+00 : f32
      %12 = vector.broadcast %cst_10 : f32 to vector<8x128xf32>
      %c0_11 = arith.constant 0 : index
      %c0_12 = arith.constant 0 : index
      %13 = vector.load %arg8[%c0_11, %c0_12] : memref<8x128xf32, #tpu.memory_space<vmem>>, vector<8x128xf32>
      tpu.vector_store %arg8[%c0_11, %c0_12], %12 {strides = array<i32>} : memref<8x128xf32, #tpu.memory_space<vmem>>, vector<8x128xf32>,
    } else {
    }
    %c0 = arith.constant 0 : index
    %c0_1 = arith.constant 0 : index
    %3 = vector.load %arg8[%c0, %c0_1] : memref<8x128xf32, #tpu.memory_space<vmem>>, vector<8x128xf32>
    %c0_2 = arith.constant 0 : index
    %c0_3 = arith.constant 0 : index
    %4 = vector.load %arg2[%c0_2, %c0_3] : memref<8x64xf32, #tpu.memory_space<vmem>>, vector<8x64xf32>
    %c0_4 = arith.constant 0 : index
    %c0_5 = arith.constant 0 : index
    %5 = vector.load %arg3[%c0_4, %c0_5] : memref<64x128xf32, #tpu.memory_space<vmem>>, vector<64x128xf32>
    %cst = arith.constant dense<0.000000e+00> : vector<8x128xf32>
    %6 = tpu.matmul %4, %5, %cst {dimension_numbers = #tpu.dot_dimension_numbers<[1], [0], [0], [1], [0, 0, 1, 1], [], []>} : vector<8x64xf32>, vector<64x128xf32>, vector<8x128xf32> -> vector<8x128xf32>
    %7 = arith.addf %3, %6 : vector<8x128xf32>
    %c0_6 = arith.constant 0 : index
    %c0_7 = arith.constant 0 : index
    %8 = vector.load %arg8[%c0_6, %c0_7] : memref<8x128xf32, #tpu.memory_space<vmem>>, vector<8x128xf32>
    tpu.vector_store %arg8[%c0_6, %c0_7], %7 {strides = array<i32>} : memref<8x128xf32, #tpu.memory_space<vmem>>, vector<8x128xf32>,
    %c0_i32_8 = arith.constant 0 : i32
    %9 = arith.cmpi eq, %arg1, %c0_i32_8 : i32
    %10 = arith.extui %9 : i1 to i32
    %c0_i32_9 = arith.constant 0 : i32
    %11 = arith.cmpi ne, %10, %c0_i32_9 : i32
    scf.if %11 {
      %c0_10 = arith.constant 0 : index
      %c0_11 = arith.constant 0 : index
      %12 = vector.load %arg8[%c0_10, %c0_11] : memref<8x128xf32, #tpu.memory_space<vmem>>, vector<8x128xf32>
      %c0_12 = arith.constant 0 : index
      %c0_13 = arith.constant 0 : index
      %13 = vector.load %arg4[%c0_12, %c0_13] : memref<1x128xf32, #tpu.memory_space<vmem>>, vector<1x128xf32>
      %14 = vector.broadcast %13 : vector<1x128xf32> to vector<8x128xf32>
      %15 = arith.addf %12, %14 : vector<8x128xf32>
      %cst_14 = arith.constant 0.000000e+00 : f32
      %16 = vector.broadcast %cst_14 : f32 to vector<8x128xf32>
      %17 = arith.maximumf %15, %16 : vector<8x128xf32>
      %c0_15 = arith.constant 0 : index
      %c0_16 = arith.constant 0 : index
      %18 = vector.load %arg5[%c0_15, %c0_16] : memref<128x128xf32, #tpu.memory_space<vmem>>, vector<128x128xf32>
      %cst_17 = arith.constant dense<0.000000e+00> : vector<8x128xf32>
      %19 = tpu.matmul %17, %18, %cst_17 {dimension_numbers = #tpu.dot_dimension_numbers<[1], [0], [0], [1], [0, 0, 1, 1], [], []>} : vector<8x128xf32>, vector<128x128xf32>, vector<8x128xf32> -> vector<8x128xf32>
      %c0_18 = arith.constant 0 : index
      %c0_19 = arith.constant 0 : index
      %20 = vector.load %arg6[%c0_18, %c0_19] : memref<1x128xf32, #tpu.memory_space<vmem>>, vector<1x128xf32>
      %21 = vector.broadcast %20 : vector<1x128xf32> to vector<8x128xf32>
      %22 = arith.addf %19, %21 : vector<8x128xf32>
      %23 = arith.mulf %22, %22 : vector<8x128xf32>
      %cst_20 = arith.constant dense<0.000000e+00> : vector<8xf32>
      %24 = vector.multi_reduction <add>, %23, %cst_20 [1] : vector<8x128xf32> to vector<8xf32>
      %25 = vector.shape_cast %24 : vector<8xf32> to vector<8x1xf32>
      %26 = math.rsqrt %25 : vector<8x1xf32>
      %27 = vector.broadcast %26 : vector<8x1xf32> to vector<8x128xf32>
      %28 = arith.mulf %22, %27 : vector<8x128xf32>
      %c0_21 = arith.constant 0 : index
      %c0_22 = arith.constant 0 : index
      %29 = vector.load %arg7[%c0_21, %c0_22] : memref<8x128xf32, #tpu.memory_space<vmem>>, vector<8x128xf32>
      tpu.vector_store %arg7[%c0_21, %c0_22], %28 {strides = array<i32>} : memref<8x128xf32, #tpu.memory_space<vmem>>, vector<8x128xf32>,
    } else {
    }
    return
  }
  func.func @transform_0(%arg0: i32, %arg1: i32) -> (i32, i32) {
    %c0_i32 = arith.constant 0 : i32
    return %arg0, %arg1 : i32, i32
  }
  func.func @transform_1(%arg0: i32, %arg1: i32) -> (i32, i32) {
    %c0_i32 = arith.constant 0 : i32
    %c0_i32_0 = arith.constant 0 : i32
    return %arg1, %c0_i32 : i32, i32
  }
  func.func @transform_2(%arg0: i32, %arg1: i32) -> (i32, i32) {
    %c0_i32 = arith.constant 0 : i32
    %c0_i32_0 = arith.constant 0 : i32
    %c0_i32_1 = arith.constant 0 : i32
    return %c0_i32, %c0_i32_0 : i32, i32
  }
  func.func @transform_3(%arg0: i32, %arg1: i32) -> (i32, i32) {
    %c0_i32 = arith.constant 0 : i32
    %c0_i32_0 = arith.constant 0 : i32
    %c0_i32_1 = arith.constant 0 : i32
    return %c0_i32, %c0_i32_0 : i32, i32
  }
  func.func @transform_4(%arg0: i32, %arg1: i32) -> (i32, i32) {
    %c0_i32 = arith.constant 0 : i32
    %c0_i32_0 = arith.constant 0 : i32
    %c0_i32_1 = arith.constant 0 : i32
    return %c0_i32, %c0_i32_0 : i32, i32
  }
  func.func @transform_5(%arg0: i32, %arg1: i32) -> (i32, i32) {
    %c0_i32 = arith.constant 0 : i32
    %c0_i32_0 = arith.constant 0 : i32
    return %arg0, %c0_i32 : i32, i32
  }
}

</mosaic_0001>

<llo_original>
// kernel: tpu_custom_call.1
$region0: #{tpu_custom_call.1}
  #allocation0 [shape = 'u32[]', space=smem, size = 0x4, offset = 0x4, fixed_abs, tag = 'smem constant byte address 0x4 - core index']
  #allocation1 [shape = 'u32[144,128]{1,0:T(1,128)}', space=vmem, size = 0x12000, scoped, tag = 'internal scratch']
  #allocation2 [shape = 'f32[8,128]{1,0:T(8,128)}', space=vmem, size = 0x1000, scoped, tag = 'scratch operand']
  %s0 = inlined_call_operand.hbm [shape: f32[16,64], index: 0, kind: input, shape index: {}]
  %s1 = inlined_call_operand.hbm [shape: f32[64,128], index: 1, kind: input, shape index: {}]
  %s2 = inlined_call_operand.vmem [shape: f32[1,128], index: 2, kind: input, shape index: {}]
  %s3 = inlined_call_operand.hbm [shape: f32[128,128], index: 3, kind: input, shape index: {}]
  %s4 = inlined_call_operand.vmem [shape: f32[1,128], index: 4, kind: input, shape index: {}]
  %s5 = inlined_call_operand.hbm [shape: f32[16,128], index: 5, kind: output, shape index: {}]
  %s6 = sld [smem:[#allocation0]]
  $region73: #{tpu_custom_call.1} parent=0
    _
  %s8 = ssub.s32 1, %s6
  %s9 = scalar_select 0, %s8, %s6
  $region1: #{tpu_custom_call.1} parent=0
    #allocation3 [shape = 'u8[8192]{0}', space=vmem, size = 0x2000, scoped, tag = 'input window, operand 0']
    #allocation4 [shape = 's32[2]{0}', space=sflag, size = 0x8, scoped, tag = 'scoped memory for tpu_custom_call.1']
    #allocation5 [shape = 's32[2]{0}', space=sflag, size = 0x8, scoped, tag = 'scoped memory for tpu_custom_call.1']
    #allocation6 [shape = 'u8[32768]{0}', space=vmem, size = 0x8000, scoped, tag = 'input window, operand 1, single buffered']
    #allocation7 [shape = 's32[1]{0}', space=sflag, size = 0x4, scoped, tag = 'scoped memory for tpu_custom_call.1']
    #allocation8 [shape = 'u8[65536]{0}', space=vmem, size = 0x10000, scoped, tag = 'input window, operand 3, single buffered']
    #allocation9 [shape = 'u8[8192]{0}', space=vmem, size = 0x2000, scoped, tag = 'output window, operand 0']
    %10 = vsyncpa [#allocation4], 0
    %s11 = scalar_lea.sflag [#allocation4], 1
    %12 = vsyncpa %s11, 0
    %13 = vsyncpa [#allocation7], 0
    %14 = vsyncpa [#allocation5], 0
    %s15 = scalar_lea.sflag [#allocation5], 1
    %16 = vsyncpa %s15, 0
    loop: start=0, step=1, limit=4
    $region2: #{tpu_custom_call.1} parent=1 // loop_pre_header
      _
    $region3: #{tpu_custom_call.1} parent=1 // loop_header
      %s18 = sphi 0, %s22
      %p19 = scmp.ge.s32.totalorder %s18, 4
      %s25 = sphi 0, %s37
      %s26 = sphi 0, %s33
      %s27 = sphi 0, %s25
      %s28 = sphi 0, %s26
      %s29 = sphi 0, %s27
      %s30 = sphi 0, %s28
      %s42 = sphi 0, %s44
      %s45 = sphi 0, %s42
      %s46 = sphi 0, %s45
      %s62 = sphi 0, %s46
      %s68 = sphi 0, %s70
      %s71 = sphi 0, %s68
      %s72 = sphi 0, %s71
      %s88 = sphi 0, %s72
      %s92 = sphi 0, %s92
      %s94 = sphi 0, %s92
      %s95 = sphi 0, %s94
      %s109 = sphi 0, %s95
      %s113 = sphi 0, %s113
      %s115 = sphi 0, %s113
      %s116 = sphi 0, %s115
      %s130 = sphi 0, %s116
      %s134 = sphi 0, %s134
      %s136 = sphi 0, %s134
      %s137 = sphi 0, %s136
      %s151 = sphi 0, %s137
      %s157 = sphi 0, %s159
      %s160 = sphi 0, %s157
      %s161 = sphi 0, %s160
      %s177 = sphi 0, %s161
    $region4: #{tpu_custom_call.1} parent=1 // loop_header_branch
      %21 = sbr.rel (%p19) target = $region8
    $region5: #{tpu_custom_call.1} parent=1 // loop_body
      %s23 = ssub.s32 %s18, 1
      %s24 = ssub.s32 %s18, 2
      %s31 = sadd.s32 1, %s26
      %p32 = scmp.ge.s32.totalorder %s31, 1
      %s33 = scalar_select %p32, 0, %s31
      %s34 = sadd.s32 1, %s25
      %s35 = scalar_select %p32, %s34, %s25
      %p36 = scmp.ge.s32.totalorder %s35, 2
      %s37 = scalar_select %p36, 0, %s35
      %s38 = ssub.s32 %s25, %s37
      %s39 = ssub.s32 %s26, %s33
      %s40 = sor.u32 %s38, %s39
      %p41 = scmp.eq.s32.totalorder %s40, 0
      %s43 = sadd.s32 %s42, 1
      %s44 = scalar_select %p41, %s42, %s43
      %p47 = pneg %p41
      %p48 = scmp.eq.s32.totalorder %s18, 1
      %p49 = por %p47, %p48
      %p50 = scmp.ne.s32.totalorder %s42, %s45
      %p51 = scmp.eq.s32.totalorder %s18, 0
      %p52 = por %p50, %p51
      %p53 = scmp.ne.s32.totalorder %s42, %s45
      %p54 = scmp.eq.s32.totalorder %s23, 1
      %p55 = por %p53, %p54
      %p56 = scmp.ne.s32.totalorder %s45, %s46
      %p57 = scmp.eq.s32.totalorder %s23, 0
      %p58 = por %p56, %p57
      %p59 = scmp.ne.s32.totalorder %s45, %s46
      %p60 = scmp.eq.s32.totalorder %s24, 1
      %p61 = por %p59, %p60
      %p63 = scmp.ne.s32.totalorder %s46, %s62
      %p64 = scmp.eq.s32.totalorder %s24, 0
      %p65 = por %p63, %p64
      %s66 = ssub.s32 %s26, %s33
      %p67 = scmp.eq.s32.totalorder %s66, 0
      %s69 = sadd.s32 %s68, 1
      %s70 = scalar_select %p67, %s68, %s69
      %p73 = pneg %p67
      %p74 = scmp.eq.s32.totalorder %s18, 1
      %p75 = por %p73, %p74
      %p76 = scmp.ne.s32.totalorder %s68, %s71
      %p77 = scmp.eq.s32.totalorder %s18, 0
      %p78 = por %p76, %p77
      %p79 = scmp.ne.s32.totalorder %s68, %s71
      %p80 = scmp.eq.s32.totalorder %s23, 1
      %p81 = por %p79, %p80
      %p82 = scmp.ne.s32.totalorder %s71, %s72
      %p83 = scmp.eq.s32.totalorder %s23, 0
      %p84 = por %p82, %p83
      %p85 = scmp.ne.s32.totalorder %s71, %s72
      %p86 = scmp.eq.s32.totalorder %s24, 1
      %p87 = por %p85, %p86
      %p89 = scmp.ne.s32.totalorder %s72, %s88
      %p90 = scmp.eq.s32.totalorder %s24, 0
      %p91 = por %p89, %p90
      %s93 = sadd.s32 %s92, 1
      %p96 = scmp.eq.s32.totalorder %s18, 1
      %p97 = scmp.ne.s32.totalorder %s92, %s94
      %p98 = scmp.eq.s32.totalorder %s18, 0
      %p99 = por %p97, %p98
      %p100 = scmp.ne.s32.totalorder %s92, %s94
      %p101 = scmp.eq.s32.totalorder %s23, 1
      %p102 = por %p100, %p101
      %p103 = scmp.ne.s32.totalorder %s94, %s95
      %p104 = scmp.eq.s32.totalorder %s23, 0
      %p105 = por %p103, %p104
      %p106 = scmp.ne.s32.totalorder %s94, %s95
      %p107 = scmp.eq.s32.totalorder %s24, 1
      %p108 = por %p106, %p107
      %p110 = scmp.ne.s32.totalorder %s95, %s109
      %p111 = scmp.eq.s32.totalorder %s24, 0
      %p112 = por %p110, %p111
      %s114 = sadd.s32 %s113, 1
      %p117 = scmp.eq.s32.totalorder %s18, 1
      %p118 = scmp.ne.s32.totalorder %s113, %s115
      %p119 = scmp.eq.s32.totalorder %s18, 0
      %p120 = por %p118, %p119
      %p121 = scmp.ne.s32.totalorder %s113, %s115
      %p122 = scmp.eq.s32.totalorder %s23, 1
      %p123 = por %p121, %p122
      %p124 = scmp.ne.s32.totalorder %s115, %s116
      %p125 = scmp.eq.s32.totalorder %s23, 0
      %p126 = por %p124, %p125
      %p127 = scmp.ne.s32.totalorder %s115, %s116
      %p128 = scmp.eq.s32.totalorder %s24, 1
      %p129 = por %p127, %p128
      %p131 = scmp.ne.s32.totalorder %s116, %s130
      %p132 = scmp.eq.s32.totalorder %s24, 0
      %p133 = por %p131, %p132
      %s135 = sadd.s32 %s134, 1
      %p138 = scmp.eq.s32.totalorder %s18, 1
      %p139 = scmp.ne.s32.totalorder %s134, %s136
      %p140 = scmp.eq.s32.totalorder %s18, 0
      %p141 = por %p139, %p140
      %p142 = scmp.ne.s32.totalorder %s134, %s136
      %p143 = scmp.eq.s32.totalorder %s23, 1
      %p144 = por %p142, %p143
      %p145 = scmp.ne.s32.totalorder %s136, %s137
      %p146 = scmp.eq.s32.totalorder %s23, 0
      %p147 = por %p145, %p146
      %p148 = scmp.ne.s32.totalorder %s136, %s137
      %p149 = scmp.eq.s32.totalorder %s24, 1
      %p150 = por %p148, %p149
      %p152 = scmp.ne.s32.totalorder %s137, %s151
      %p153 = scmp.eq.s32.totalorder %s24, 0
      %p154 = por %p152, %p153
      %s155 = ssub.s32 %s25, %s37
      %p156 = scmp.eq.s32.totalorder %s155, 0
      %s158 = sadd.s32 %s157, 1
      %s159 = scalar_select %p156, %s157, %s158
      %p162 = pneg %p156
      %p163 = scmp.eq.s32.totalorder %s18, 1
      %p164 = por %p162, %p163
      %p165 = scmp.ne.s32.totalorder %s157, %s160
      %p166 = scmp.eq.s32.totalorder %s18, 0
      %p167 = por %p165, %p166
      %p168 = scmp.ne.s32.totalorder %s157, %s160
      %p169 = scmp.eq.s32.totalorder %s23, 1
      %p170 = por %p168, %p169
      %p171 = scmp.ne.s32.totalorder %s160, %s161
      %p172 = scmp.eq.s32.totalorder %s23, 0
      %p173 = por %p171, %p172
      %p174 = scmp.ne.s32.totalorder %s160, %s161
      %p175 = scmp.eq.s32.totalorder %s24, 1
      %p176 = por %p174, %p175
      %p178 = scmp.ne.s32.totalorder %s161, %s177
      %p179 = scmp.eq.s32.totalorder %s24, 0
      %p180 = por %p178, %p179
      %p181 = scmp.le.s32.totalorder 1, %s18
      %p182 = scmp.lt.s32.totalorder %s18, 3
      %p183 = pnand %p181, %p182
      %p184 = pneg %p183
      // Predicated region
      $region9: #{tpu_custom_call.1} parent=5 // pred_check
        _
      $region10: #{tpu_custom_call.1} parent=5 // pred_check_branch
        %186 = sbr.rel (%p183) target = $region12
      $region11: #{tpu_custom_call.1} parent=5 // pred_region
        %s187 = ssub.s32 %s18, 1
        // Predicated region
        $region13: #{tpu_custom_call.1} parent=11 // pred_check
          %p188 = pneg %p84
        $region14: #{tpu_custom_call.1} parent=11 // pred_check_branch
          %190 = sbr.rel (%p188) target = $region16
        $region15: #{tpu_custom_call.1} parent=11 // pred_region
          %s191 = smul.u32 8, %s28
          %s193 = ssub.s32 1024, 1024
          %194 = vsyncadd [#allocation7], %s193
          %s195 = smul.addr %s191, 128
          %s196 = scalar_lea.hbm %s1, %s195
          %s197 = sshll.u32 [#allocation6], 4
          %s198 = int_to_ptr.vmem [resolvable:$true] %s197
          %203 = dma.hbm_to_vmem [thread:$0]  %s196, 1024, %s198, [#allocation7], 128, 128, 8
        $region16: #{tpu_custom_call.1} parent=11 // pred_fallthru
          _
        // Predicated region
        $region17: #{tpu_custom_call.1} parent=11 // pred_check
          %p204 = pneg %p105
        $region18: #{tpu_custom_call.1} parent=11 // pred_check_branch
          %206 = sbr.rel (%p204) target = $region20
        $region19: #{tpu_custom_call.1} parent=11 // pred_region
          _
        $region20: #{tpu_custom_call.1} parent=11 // pred_fallthru
          _
        // Predicated region
        $region21: #{tpu_custom_call.1} parent=11 // pred_check
          %p207 = pneg %p126
        $region22: #{tpu_custom_call.1} parent=11 // pred_check_branch
          %209 = sbr.rel (%p207) target = $region24
        $region23: #{tpu_custom_call.1} parent=11 // pred_region
          %s211 = ssub.s32 2048, 2048
          %212 = vsyncadd [#allocation7], %s211
          %s213 = sshll.u32 [#allocation8], 4
          %s214 = int_to_ptr.vmem [resolvable:$true] %s213
          %219 = dma.hbm_to_vmem [thread:$0]  %s3, 2048, %s214, [#allocation7], 128, 128, 8
        $region24: #{tpu_custom_call.1} parent=11 // pred_fallthru
          _
        // Predicated region
        $region25: #{tpu_custom_call.1} parent=11 // pred_check
          %p220 = pneg %p147
        $region26: #{tpu_custom_call.1} parent=11 // pred_check_branch
          %222 = sbr.rel (%p220) target = $region28
        $region27: #{tpu_custom_call.1} parent=11 // pred_region
          _
        $region28: #{tpu_custom_call.1} parent=11 // pred_fallthru
          _
      $region12: #{tpu_custom_call.1} parent=5 // pred_fallthru
        _
      %p223 = scmp.lt.s32.totalorder %s18, 2
      // Predicated region
      $region29: #{tpu_custom_call.1} parent=5 // pred_check
        %p224 = pneg %p223
      $region30: #{tpu_custom_call.1} parent=5 // pred_check_branch
        %226 = sbr.rel (%p224) target = $region32
      $region31: #{tpu_custom_call.1} parent=5 // pred_region
        // Predicated region
        $region33: #{tpu_custom_call.1} parent=31 // pred_check
          %p227 = pneg %p52
        $region34: #{tpu_custom_call.1} parent=31 // pred_check_branch
          %229 = sbr.rel (%p227) target = $region36
        $region35: #{tpu_custom_call.1} parent=31 // pred_region
          %s230 = sand.u32 %s42, 1
          %s231 = scalar_lea.sflag [#allocation4], %s230
          %s232 = sand.u32 %s42, 1
          %s233 = smul.addr %s232, 8
          %s234 = scalar_lea.vmem [#allocation3], %s233
          %s236 = ssub.s32 128, 128
          %237 = vsyncadd %s231, %s236
          %s238 = sadd.s32 %s26, %s25
          %s239 = smul.addr %s238, 128
          %s240 = scalar_lea.hbm %s0, %s239
          %s242 = sshll.u32 %s234, 4
          %s243 = int_to_ptr.vmem [resolvable:$true] %s242
          %245 = dma.hbm_to_vmem [thread:$0]  %s240, 128, %s243, %s231
        $region36: #{tpu_custom_call.1} parent=31 // pred_fallthru
          _
      $region32: #{tpu_custom_call.1} parent=5 // pred_fallthru
        _
      %p246 = scmp.le.s32.totalorder 1, %s18
      %p247 = scmp.lt.s32.totalorder %s18, 3
      %p248 = pnand %p246, %p247
      %p249 = pneg %p248
      // Predicated region
      $region37: #{tpu_custom_call.1} parent=5 // pred_check
        _
      $region38: #{tpu_custom_call.1} parent=5 // pred_check_branch
        %251 = sbr.rel (%p248) target = $region40
      $region39: #{tpu_custom_call.1} parent=5 // pred_region
        %s252 = ssub.s32 %s18, 1
        %s253 = sand.u32 %s45, 1
        %s254 = scalar_lea.sflag [#allocation4], %s253
        %s255 = sand.u32 %s45, 1
        %s256 = smul.addr %s255, 8
        %s257 = scalar_lea.vmem [#allocation3], %s256
        // Predicated region
        $region41: #{tpu_custom_call.1} parent=39 // pred_check
          %p258 = pneg %p58
        $region42: #{tpu_custom_call.1} parent=39 // pred_check_branch
          %260 = sbr.rel (%p258) target = $region44
        $region43: #{tpu_custom_call.1} parent=39 // pred_region
          %261 = dma.done %s254, 128
        $region44: #{tpu_custom_call.1} parent=39 // pred_fallthru
          _
        // Predicated region
        $region45: #{tpu_custom_call.1} parent=39 // pred_check
          %p262 = pneg %p84
        $region46: #{tpu_custom_call.1} parent=39 // pred_check_branch
          %264 = sbr.rel (%p262) target = $region48
        $region47: #{tpu_custom_call.1} parent=39 // pred_region
          %265 = dma.done [#allocation7], 1024
        $region48: #{tpu_custom_call.1} parent=39 // pred_fallthru
          _
        // Predicated region
        $region49: #{tpu_custom_call.1} parent=39 // pred_check
          %p266 = pneg %p126
        $region50: #{tpu_custom_call.1} parent=39 // pred_check_branch
          %268 = sbr.rel (%p266) target = $region52
        $region51: #{tpu_custom_call.1} parent=39 // pred_region
          %269 = dma.done [#allocation7], 2048
        $region52: #{tpu_custom_call.1} parent=39 // pred_fallthru
          _
        %s270 = sand.u32 %s45, 1
        %s271 = scalar_lea.sflag [#allocation4], %s270
        %s272 = sand.u32 %s45, 1
        %s273 = smul.addr %s272, 8
        %s274 = scalar_lea.vmem [#allocation3], %s273
        %p275 = pneg %p58
        %p276 = pneg %p55
        %p277 = pneg %p84
        %p278 = pneg %p81
        %p279 = pneg %p105
        %p280 = pneg %p102
        %p281 = pneg %p126
        %p282 = pneg %p123
        %p283 = pneg %p147
        %p284 = pneg %p144
        %p285 = pneg %p173
        %p286 = pneg %p170
        %s287 = sand.u32 %s160, 1
        %s288 = scalar_lea.sflag [#allocation5], %s287
        %s289 = sand.u32 %s160, 1
        %s290 = smul.addr %s289, 8
        %s291 = scalar_lea.vmem [#allocation9], %s290
        %s292 = smul.u32 8, %s28
        %p293 = scmp.eq.s32.totalorder %s28, 0
        // Predicated region
        $region53: #{tpu_custom_call.1} parent=39 // pred_check
          %p294 = pneg %p293
        $region54: #{tpu_custom_call.1} parent=39 // pred_check_branch
          %296 = sbr.rel (%p294) target = $region56
        $region55: #{tpu_custom_call.1} parent=39 // pred_region
          %297 = vst [vmem:[#allocation2] sm:$0xff] 0.0
        $region56: #{tpu_custom_call.1} parent=39 // pred_fallthru
          _
        %v298 = vld [vmem:[#allocation2] sm:$0xff]
        %v299 = vld [vmem:[%s257] sm:$0xff]
        %v300 = vld [vmem:[#allocation6] sm:$0xff]
        %v301 = vld [vmem:[#allocation6 + $0x8] sm:$0xff]
        %v302 = vld [vmem:[#allocation6 + $0x10] sm:$0xff]
        %v303 = vld [vmem:[#allocation6 + $0x18] sm:$0xff]
        %v304 = vld [vmem:[#allocation6 + $0x20] sm:$0xff]
        %v305 = vld [vmem:[#allocation6 + $0x28] sm:$0xff]
        %v306 = vld [vmem:[#allocation6 + $0x30] sm:$0xff]
        %v307 = vld [vmem:[#allocation6 + $0x38] sm:$0xff]
        %vm308 = vcmask 523264
        %v310 = vsel %vm308, %v299, 0
        %312 = vmatprep.subr.mxu0 0.0
        %313 = vmatpush1.msra.mxu0 %v300
        %314 = vmatprep.subr.mxu0 0.0
        %315 = vmatpush1.msra.mxu0 %v301
        %316 = vmatprep.subr.mxu0 0.0
        %317 = vmatpush1.msra.mxu0 %v302
        %318 = vmatprep.subr.mxu0 0.0
        %319 = vmatpush1.msra.mxu0 %v303
        %320 = vmatprep.subr.mxu0 0.0
        %321 = vmatpush1.msra.mxu0 %v304
        %322 = vmatprep.subr.mxu0 0.0
        %323 = vmatpush1.msra.mxu0 %v305
        %324 = vmatprep.subr.mxu0 0.0
        %325 = vmatpush1.msra.mxu0 %v306
        %326 = vmatprep.subr.mxu0 0.0
        %327 = vmatpush1.msra.mxu0 %v307
        %328 = vmatprep.subr.mxu0 0.0
        %329 = vmatpush1.msra.mxu0 0.0
        %330 = vmatprep.subr.mxu0 0.0
        %331 = vmatpush1.msra.mxu0 0.0
        %332 = vmatprep.subr.mxu0 0.0
        %333 = vmatpush1.msra.mxu0 0.0
        %334 = vmatprep.subr.mxu0 0.0
        %335 = vmatpush1.msra.mxu0 0.0
        %336 = vmatprep.subr.mxu0 0.0
        %337 = vmatpush1.msra.mxu0 0.0
        %338 = vmatprep.subr.mxu0 0.0
        %339 = vmatpush1.msra.mxu0 0.0
        %340 = vmatprep.subr.mxu0 0.0
        %341 = vmatpush1.msra.mxu0 0.0
        %342 = vmatprep.subr.mxu0 0.0
        %343 = vmatpush1.msra.mxu0 0.0
        %344 = vmatprep.subr.mxu0 0.0
        %345 = vmatpush1.msra.mxu0 0.0
        %346 = vmatprep.subr.mxu0 0.0
        %347 = vmatpush1.msra.mxu0 0.0
        %348 = vmatprep.subr.mxu0 0.0
        %349 = vmatpush1.msra.mxu0 0.0
        %350 = vmatprep.subr.mxu0 0.0
        %351 = vmatpush1.msra.mxu0 0.0
        %352 = vmatprep.subr.mxu0 0.0
        %353 = vmatpush1.msra.mxu0 0.0
        %354 = vmatprep.subr.mxu0 0.0
        %355 = vmatpush1.msra.mxu0 0.0
        %356 = vmatprep.subr.mxu0 0.0
        %357 = vmatpush1.msra.mxu0 0.0
        %358 = vmatprep.subr.mxu0 0.0
        %359 = vmatpush1.msra.mxu0 0.0
        %360 = vmatprep.subr.mxu0 0.0
        %361 = vmatpush1.msra.mxu0 0.0
        %362 = vmatprep.subr.mxu0 0.0
        %363 = vmatpush1.msra.mxu0 0.0
        %364 = vmatprep.subr.mxu0 0.0
        %365 = vmatpush1.msra.mxu0 0.0
        %366 = vmatprep.subr.mxu0 0.0
        %367 = vmatpush1.msra.mxu0 0.0
        %368 = vmatprep.subr.mxu0 0.0
        %369 = vmatpush1.msra.mxu0 0.0
        %370 = vmatprep.subr.mxu0 0.0
        %371 = vmatpush1.msra.mxu0 0.0
        %372 = vmatprep.subr.mxu0 0.0
        %373 = vmatpush1.msra.mxu0 0.0
        %374 = vmatprep.subr.mxu0 0.0
        %375 = vmatpush1.msra.mxu0 0.0
        %376 = vmatprep.mubr.f32.mxu0 0.0
        %377 = vmatmul.mubr.f32.gmra.mrb[0].mxu0 %v310
        %v378 = vpop.f32.mrb[0].mxu0
        %v379 = vadd.f32 0.0, %v378
        %v380 = vpop.f32.mrb[0].mxu0
        %381 = vdwg.mxu0
        %v382 = vadd.f32 %v298, %v379
        %383 = vst [vmem:[#allocation2] sm:$0xff] %v382
        // Predicated region
        $region57: #{tpu_custom_call.1} parent=39 // pred_check
          %p384 = pneg %p293
        $region58: #{tpu_custom_call.1} parent=39 // pred_check_branch
          %386 = sbr.rel (%p384) target = $region60
        $region59: #{tpu_custom_call.1} parent=39 // pred_region
          %v387 = vld [vmem:[#allocation2] sm:$0xff]
          %v388 = vld [vmem:[%s2] sm:$0x1]
          %v390 = vlaneseq
          %v391 = vshrl.u32 %v390, 7
          %v392 = vsub.s32 0, %v391
          %v393 = vrot.slane %v388, %v392
          %v395 = vadd.f32 %v387, %v393
          %v396 = vmax.f32 %v395, 0.0
          %v397 = vld [vmem:[#allocation8] sm:$0xff]
          %v398 = vld [vmem:[#allocation8 + $0x8] sm:$0xff]
          %v399 = vld [vmem:[#allocation8 + $0x10] sm:$0xff]
          %v400 = vld [vmem:[#allocation8 + $0x18] sm:$0xff]
          %v401 = vld [vmem:[#allocation8 + $0x20] sm:$0xff]
          %v402 = vld [vmem:[#allocation8 + $0x28] sm:$0xff]
          %v403 = vld [vmem:[#allocation8 + $0x30] sm:$0xff]
          %v404 = vld [vmem:[#allocation8 + $0x38] sm:$0xff]
          %v405 = vld [vmem:[#allocation8 + $0x40] sm:$0xff]
          %v406 = vld [vmem:[#allocation8 + $0x48] sm:$0xff]
          %v407 = vld [vmem:[#allocation8 + $0x50] sm:$0xff]
          %v408 = vld [vmem:[#allocation8 + $0x58] sm:$0xff]
          %v409 = vld [vmem:[#allocation8 + $0x60] sm:$0xff]
          %v410 = vld [vmem:[#allocation8 + $0x68] sm:$0xff]
          %v411 = vld [vmem:[#allocation8 + $0x70] sm:$0xff]
          %v412 = vld [vmem:[#allocation8 + $0x78] sm:$0xff]
          %v413 = vld [vmem:[%s4] sm:$0x1]
          %v415 = vlaneseq
          %v416 = vshrl.u32 %v415, 7
          %v417 = vsub.s32 0, %v416
          %v418 = vrot.slane %v413, %v417
          %420 = vmatprep.subr.mxu0 0.0
          %421 = vmatpush1.msra.mxu0 %v397
          %422 = vmatprep.subr.mxu0 0.0
          %423 = vmatpush1.msra.mxu0 %v398
          %424 = vmatprep.subr.mxu0 0.0
          %425 = vmatpush1.msra.mxu0 %v399
          %426 = vmatprep.subr.mxu0 0.0
          %427 = vmatpush1.msra.mxu0 %v400
          %428 = vmatprep.subr.mxu0 0.0
          %429 = vmatpush1.msra.mxu0 %v401
          %430 = vmatprep.subr.mxu0 0.0
          %431 = vmatpush1.msra.mxu0 %v402
          %432 = vmatprep.subr.mxu0 0.0
          %433 = vmatpush1.msra.mxu0 %v403
          %434 = vmatprep.subr.mxu0 0.0
          %435 = vmatpush1.msra.mxu0 %v404
          %436 = vmatprep.subr.mxu0 0.0
          %437 = vmatpush1.msra.mxu0 %v405
          %438 = vmatprep.subr.mxu0 0.0
          %439 = vmatpush1.msra.mxu0 %v406
          %440 = vmatprep.subr.mxu0 0.0
          %441 = vmatpush1.msra.mxu0 %v407
          %442 = vmatprep.subr.mxu0 0.0
          %443 = vmatpush1.msra.mxu0 %v408
          %444 = vmatprep.subr.mxu0 0.0
          %445 = vmatpush1.msra.mxu0 %v409
          %446 = vmatprep.subr.mxu0 0.0
          %447 = vmatpush1.msra.mxu0 %v410
          %448 = vmatprep.subr.mxu0 0.0
          %449 = vmatpush1.msra.mxu0 %v411
          %450 = vmatprep.subr.mxu0 0.0
          %451 = vmatpush1.msra.mxu0 %v412
          %452 = vmatprep.subr.mxu0 0.0
          %453 = vmatpush1.msra.mxu0 0.0
          %454 = vmatprep.subr.mxu0 0.0
          %455 = vmatpush1.msra.mxu0 0.0
          %456 = vmatprep.subr.mxu0 0.0
          %457 = vmatpush1.msra.mxu0 0.0
          %458 = vmatprep.subr.mxu0 0.0
          %459 = vmatpush1.msra.mxu0 0.0
          %460 = vmatprep.subr.mxu0 0.0
          %461 = vmatpush1.msra.mxu0 0.0
          %462 = vmatprep.subr.mxu0 0.0
          %463 = vmatpush1.msra.mxu0 0.0
          %464 = vmatprep.subr.mxu0 0.0
          %465 = vmatpush1.msra.mxu0 0.0
          %466 = vmatprep.subr.mxu0 0.0
          %467 = vmatpush1.msra.mxu0 0.0
          %468 = vmatprep.subr.mxu0 0.0
          %469 = vmatpush1.msra.mxu0 0.0
          %470 = vmatprep.subr.mxu0 0.0
          %471 = vmatpush1.msra.mxu0 0.0
          %472 = vmatprep.subr.mxu0 0.0
          %473 = vmatpush1.msra.mxu0 0.0
          %474 = vmatprep.subr.mxu0 0.0
          %475 = vmatpush1.msra.mxu0 0.0
          %476 = vmatprep.subr.mxu0 0.0
          %477 = vmatpush1.msra.mxu0 0.0
          %478 = vmatprep.subr.mxu0 0.0
          %479 = vmatpush1.msra.mxu0 0.0
          %480 = vmatprep.subr.mxu0 0.0
          %481 = vmatpush1.msra.mxu0 0.0
          %482 = vmatprep.subr.mxu0 0.0
          %483 = vmatpush1.msra.mxu0 0.0
          %484 = vmatprep.mubr.f32.mxu0 0.0
          %485 = vmatmul.mubr.f32.gmra.mrb[0].mxu0 %v396
          %v486 = vpop.f32.mrb[0].mxu0
          %v487 = vadd.f32 %v418, %v486
          %v488 = vpop.f32.mrb[0].mxu0
          %489 = vdwg.mxu0
          %v490 = vmul.f32 %v487, %v487
          %491 = vadd.xlane.f32.xlu0 %v490
          %v492 = vpop.xlane.xlu0 %491
          %v493 = vrsqrt.pop %v492
          %v494 = vmul.f32 %v487, %v493
          %495 = vst [vmem:[%s291] sm:$0xff] %v494
        $region60: #{tpu_custom_call.1} parent=39 // pred_fallthru
          _
        %s496 = sand.u32 %s160, 1
        %s497 = scalar_lea.sflag [#allocation5], %s496
        %s498 = sand.u32 %s160, 1
        %s499 = smul.addr %s498, 8
        %s500 = scalar_lea.vmem [#allocation9], %s499
        // Predicated region
        $region61: #{tpu_custom_call.1} parent=39 // pred_check
          %p501 = pneg %p170
        $region62: #{tpu_custom_call.1} parent=39 // pred_check_branch
          %503 = sbr.rel (%p501) target = $region64
        $region63: #{tpu_custom_call.1} parent=39 // pred_region
          %s505 = ssub.s32 128, 128
          %506 = vsyncadd %s497, %s505
          %s507 = smul.addr %s27, 128
          %s508 = scalar_lea.hbm %s5, %s507
          %s510 = sshll.u32 %s500, 4
          %s511 = int_to_ptr.vmem [resolvable:$true] %s510
          %513 = dma.vmem_to_hbm [thread:$0]  %s511, 128, %s508, %s497
        $region64: #{tpu_custom_call.1} parent=39 // pred_fallthru
          _
      $region40: #{tpu_custom_call.1} parent=5 // pred_fallthru
        _
      %p514 = scmp.le.s32.totalorder 2, %s18
      // Predicated region
      $region65: #{tpu_custom_call.1} parent=5 // pred_check
        %p515 = pneg %p514
      $region66: #{tpu_custom_call.1} parent=5 // pred_check_branch
        %517 = sbr.rel (%p515) target = $region68
      $region67: #{tpu_custom_call.1} parent=5 // pred_region
        %s518 = ssub.s32 %s18, 2
        // Predicated region
        $region69: #{tpu_custom_call.1} parent=67 // pred_check
          %p519 = pneg %p176
        $region70: #{tpu_custom_call.1} parent=67 // pred_check_branch
          %521 = sbr.rel (%p519) target = $region72
        $region71: #{tpu_custom_call.1} parent=67 // pred_region
          %s522 = sand.u32 %s161, 1
          %s523 = scalar_lea.sflag [#allocation5], %s522
          %s524 = sand.u32 %s161, 1
          %s525 = smul.addr %s524, 8
          %s526 = scalar_lea.vmem [#allocation9], %s525
          %527 = dma.done %s523, 128
        $region72: #{tpu_custom_call.1} parent=67 // pred_fallthru
          _
      $region68: #{tpu_custom_call.1} parent=5 // pred_fallthru
        _
    $region6: #{tpu_custom_call.1} parent=1 // loop_footer
      %s22 = sadd.s32 1, %s18
    $region7: #{tpu_custom_call.1} parent=1 // loop_footer_branch
      %17 = sbr.rel target = $region3
    $region8: #{tpu_custom_call.1} parent=1 // loop_exit
      _
    %528 = vsyncpa [#allocation4], 1
    %s529 = scalar_lea.sflag [#allocation4], 1
    %530 = vsyncpa %s529, 1
    %531 = vsyncpa [#allocation7], 1
    %532 = vsyncpa [#allocation5], 1
    %s533 = scalar_lea.sflag [#allocation5], 1
    %534 = vsyncpa %s533, 1

// kernel: tpu_custom_call.1
$region0: #{tpu_custom_call.1}
  #allocation0 [shape = 'u32[]', space=smem, size = 0x4, offset = 0x4, fixed_abs, tag = 'smem constant byte address 0x4 - core index']
  #allocation1 [shape = 'u32[144,128]{1,0:T(1,128)}', space=vmem, size = 0x12000, scoped, tag = 'internal scratch']
  #allocation2 [shape = 'f32[8,128]{1,0:T(8,128)}', space=vmem, size = 0x1000, scoped, tag = 'scratch operand']
  %s0 = inlined_call_operand.hbm [shape: f32[16,64], index: 0, kind: input, shape index: {}]
  %s1 = inlined_call_operand.hbm [shape: f32[64,128], index: 1, kind: input, shape index: {}]
  %s2 = inlined_call_operand.vmem [shape: f32[1,128], index: 2, kind: input, shape index: {}]
  %s3 = inlined_call_operand.hbm [shape: f32[128,128], index: 3, kind: input, shape index: {}]
  %s4 = inlined_call_operand.vmem [shape: f32[1,128], index: 4, kind: input, shape index: {}]
  %s5 = inlined_call_operand.hbm [shape: f32[16,128], index: 5, kind: output, shape index: {}]
  %s6 = sld [smem:[#allocation0]]
  $region73: #{tpu_custom_call.1} parent=0
    _
  %s8 = ssub.s32 1, %s6
  %s9 = scalar_select 0, %s8, %s6
  $region1: #{tpu_custom_call.1} parent=0
    #allocation3 [shape = 'u8[8192]{0}', space=vmem, size = 0x2000, scoped, tag = 'input window, operand 0']
    #allocation4 [shape = 's32[2]{0}', space=sflag, size = 0x8, scoped, tag = 'scoped memory for tpu_custom_call.1']
    #allocation5 [shape = 's32[2]{0}', space=sflag, size = 0x8, scoped, tag = 'scoped memory for tpu_custom_call.1']
    #allocation6 [shape = 'u8[32768]{0}', space=vmem, size = 0x8000, scoped, tag = 'input window, operand 1, single buffered']
    #allocation7 [shape = 's32[1]{0}', space=sflag, size = 0x4, scoped, tag = 'scoped memory for tpu_custom_call.1']
    #allocation8 [shape = 'u8[65536]{0}', space=vmem, size = 0x10000, scoped, tag = 'input window, operand 3, single buffered']
    #allocation9 [shape = 'u8[8192]{0}', space=vmem, size = 0x2000, scoped, tag = 'output window, operand 0']
    %10 = vsyncpa [#allocation4], 0
    %s11 = scalar_lea.sflag [#allocation4], 1
    %12 = vsyncpa %s11, 0
    %13 = vsyncpa [#allocation7], 0
    %14 = vsyncpa [#allocation5], 0
    %s15 = scalar_lea.sflag [#allocation5], 1
    %16 = vsyncpa %s15, 0
    loop: start=0, step=1, limit=4
    $region2: #{tpu_custom_call.1} parent=1 // loop_pre_header
      _
    $region3: #{tpu_custom_call.1} parent=1 // loop_header
      %s18 = sphi 0, %s22
      %p19 = scmp.ge.s32.totalorder %s18, 4
      %s25 = sphi 0, %s37
      %s26 = sphi 0, %s33
      %s27 = sphi 0, %s25
      %s28 = sphi 0, %s26
      %s29 = sphi 0, %s27
      %s30 = sphi 0, %s28
      %s42 = sphi 0, %s44
      %s45 = sphi 0, %s42
      %s46 = sphi 0, %s45
      %s62 = sphi 0, %s46
      %s68 = sphi 0, %s70
      %s71 = sphi 0, %s68
      %s72 = sphi 0, %s71
      %s88 = sphi 0, %s72
      %s92 = sphi 0, %s92
      %s94 = sphi 0, %s92
      %s95 = sphi 0, %s94
      %s109 = sphi 0, %s95
      %s113 = sphi 0, %s113
      %s115 = sphi 0, %s113
      %s116 = sphi 0, %s115
      %s130 = sphi 0, %s116
      %s134 = sphi 0, %s134
      %s136 = sphi 0, %s134
      %s137 = sphi 0, %s136
      %s151 = sphi 0, %s137
      %s157 = sphi 0, %s159
      %s160 = sphi 0, %s157
      %s161 = sphi 0, %s160
      %s177 = sphi 0, %s161
    $region4: #{tpu_custom_call.1} parent=1 // loop_header_branch
      %21 = sbr.rel (%p19) target = $region8
    $region5: #{tpu_custom_call.1} parent=1 // loop_body
      %s23 = ssub.s32 %s18, 1
      %s24 = ssub.s32 %s18, 2
      %s31 = sadd.s32 1, %s26
      %p32 = scmp.ge.s32.totalorder %s31, 1
      %s33 = scalar_select %p32, 0, %s31
      %s34 = sadd.s32 1, %s25
      %s35 = scalar_select %p32, %s34, %s25
      %p36 = scmp.ge.s32.totalorder %s35, 2
      %s37 = scalar_select %p36, 0, %s35
      %s38 = ssub.s32 %s25, %s37
      %s39 = ssub.s32 %s26, %s33
      %s40 = sor.u32 %s38, %s39
      %p41 = scmp.eq.s32.totalorder %s40, 0
      %s43 = sadd.s32 %s42, 1
      %s44 = scalar_select %p41, %s42, %s43
      %p47 = pneg %p41
      %p48 = scmp.eq.s32.totalorder %s18, 1
      %p49 = por %p47, %p48
      %p50 = scmp.ne.s32.totalorder %s42, %s45
      %p51 = scmp.eq.s32.totalorder %s18, 0
      %p52 = por %p50, %p51
      %p53 = scmp.ne.s32.totalorder %s42, %s45
      %p54 = scmp.eq.s32.totalorder %s23, 1
      %p55 = por %p53, %p54
      %p56 = scmp.ne.s32.totalorder %s45, %s46
      %p57 = scmp.eq.s32.totalorder %s23, 0
      %p58 = por %p56, %p57
      %p59 = scmp.ne.s32.totalorder %s45, %s46
      %p60 = scmp.eq.s32.totalorder %s24, 1
      %p61 = por %p59, %p60
      %p63 = scmp.ne.s32.totalorder %s46, %s62
      %p64 = scmp.eq.s32.totalorder %s24, 0
      %p65 = por %p63, %p64
      %s66 = ssub.s32 %s26, %s33
      %p67 = scmp.eq.s32.totalorder %s66, 0
      %s69 = sadd.s32 %s68, 1
      %s70 = scalar_select %p67, %s68, %s69
      %p73 = pneg %p67
      %p74 = scmp.eq.s32.totalorder %s18, 1
      %p75 = por %p73, %p74
      %p76 = scmp.ne.s32.totalorder %s68, %s71
      %p77 = scmp.eq.s32.totalorder %s18, 0
      %p78 = por %p76, %p77
      %p79 = scmp.ne.s32.totalorder %s68, %s71
      %p80 = scmp.eq.s32.totalorder %s23, 1
      %p81 = por %p79, %p80
      %p82 = scmp.ne.s32.totalorder %s71, %s72
      %p83 = scmp.eq.s32.totalorder %s23, 0
      %p84 = por %p82, %p83
      %p85 = scmp.ne.s32.totalorder %s71, %s72
      %p86 = scmp.eq.s32.totalorder %s24, 1
      %p87 = por %p85, %p86
      %p89 = scmp.ne.s32.totalorder %s72, %s88
      %p90 = scmp.eq.s32.totalorder %s24, 0
      %p91 = por %p89, %p90
      %s93 = sadd.s32 %s92, 1
      %p96 = scmp.eq.s32.totalorder %s18, 1
      %p97 = scmp.ne.s32.totalorder %s92, %s94
      %p98 = scmp.eq.s32.totalorder %s18, 0
      %p99 = por %p97, %p98
      %p100 = scmp.ne.s32.totalorder %s92, %s94
      %p101 = scmp.eq.s32.totalorder %s23, 1
      %p102 = por %p100, %p101
      %p103 = scmp.ne.s32.totalorder %s94, %s95
      %p104 = scmp.eq.s32.totalorder %s23, 0
      %p105 = por %p103, %p104
      %p106 = scmp.ne.s32.totalorder %s94, %s95
      %p107 = scmp.eq.s32.totalorder %s24, 1
      %p108 = por %p106, %p107
      %p110 = scmp.ne.s32.totalorder %s95, %s109
      %p111 = scmp.eq.s32.totalorder %s24, 0
      %p112 = por %p110, %p111
      %s114 = sadd.s32 %s113, 1
      %p117 = scmp.eq.s32.totalorder %s18, 1
      %p118 = scmp.ne.s32.totalorder %s113, %s115
      %p119 = scmp.eq.s32.totalorder %s18, 0
      %p120 = por %p118, %p119
      %p121 = scmp.ne.s32.totalorder %s113, %s115
      %p122 = scmp.eq.s32.totalorder %s23, 1
      %p123 = por %p121, %p122
      %p124 = scmp.ne.s32.totalorder %s115, %s116
      %p125 = scmp.eq.s32.totalorder %s23, 0
      %p126 = por %p124, %p125
      %p127 = scmp.ne.s32.totalorder %s115, %s116
      %p128 = scmp.eq.s32.totalorder %s24, 1
      %p129 = por %p127, %p128
      %p131 = scmp.ne.s32.totalorder %s116, %s130
      %p132 = scmp.eq.s32.totalorder %s24, 0
      %p133 = por %p131, %p132
      %s135 = sadd.s32 %s134, 1
      %p138 = scmp.eq.s32.totalorder %s18, 1
      %p139 = scmp.ne.s32.totalorder %s134, %s136
      %p140 = scmp.eq.s32.totalorder %s18, 0
      %p141 = por %p139, %p140
      %p142 = scmp.ne.s32.totalorder %s134, %s136
      %p143 = scmp.eq.s32.totalorder %s23, 1
      %p144 = por %p142, %p143
      %p145 = scmp.ne.s32.totalorder %s136, %s137
      %p146 = scmp.eq.s32.totalorder %s23, 0
      %p147 = por %p145, %p146
      %p148 = scmp.ne.s32.totalorder %s136, %s137
      %p149 = scmp.eq.s32.totalorder %s24, 1
      %p150 = por %p148, %p149
      %p152 = scmp.ne.s32.totalorder %s137, %s151
      %p153 = scmp.eq.s32.totalorder %s24, 0
      %p154 = por %p152, %p153
      %s155 = ssub.s32 %s25, %s37
      %p156 = scmp.eq.s32.totalorder %s155, 0
      %s158 = sadd.s32 %s157, 1
      %s159 = scalar_select %p156, %s157, %s158
      %p162 = pneg %p156
      %p163 = scmp.eq.s32.totalorder %s18, 1
      %p164 = por %p162, %p163
      %p165 = scmp.ne.s32.totalorder %s157, %s160
      %p166 = scmp.eq.s32.totalorder %s18, 0
      %p167 = por %p165, %p166
      %p168 = scmp.ne.s32.totalorder %s157, %s160
      %p169 = scmp.eq.s32.totalorder %s23, 1
      %p170 = por %p168, %p169
      %p171 = scmp.ne.s32.totalorder %s160, %s161
      %p172 = scmp.eq.s32.totalorder %s23, 0
      %p173 = por %p171, %p172
      %p174 = scmp.ne.s32.totalorder %s160, %s161
      %p175 = scmp.eq.s32.totalorder %s24, 1
      %p176 = por %p174, %p175
      %p178 = scmp.ne.s32.totalorder %s161, %s177
      %p179 = scmp.eq.s32.totalorder %s24, 0
      %p180 = por %p178, %p179
      %p181 = scmp.le.s32.totalorder 1, %s18
      %p182 = scmp.lt.s32.totalorder %s18, 3
      %p183 = pnand %p181, %p182
      %p184 = pneg %p183
      // Predicated region
      $region9: #{tpu_custom_call.1} parent=5 // pred_check
        _
      $region10: #{tpu_custom_call.1} parent=5 // pred_check_branch
        %186 = sbr.rel (%p183) target = $region12
      $region11: #{tpu_custom_call.1} parent=5 // pred_region
        %s187 = ssub.s32 %s18, 1
        // Predicated region
        $region13: #{tpu_custom_call.1} parent=11 // pred_check
          %p188 = pneg %p84
        $region14: #{tpu_custom_call.1} parent=11 // pred_check_branch
          %190 = sbr.rel (%p188) target = $region16
        $region15: #{tpu_custom_call.1} parent=11 // pred_region
          %s191 = smul.u32 8, %s28
          %s193 = ssub.s32 1024, 1024
          %194 = vsyncadd [#allocation7], %s193
          %s195 = smul.addr %s191, 128
          %s196 = scalar_lea.hbm %s1, %s195
          %s197 = sshll.u32 [#allocation6], 4
          %s198 = int_to_ptr.vmem [resolvable:$true] %s197
          %203 = dma.hbm_to_vmem [thread:$0]  %s196, 1024, %s198, [#allocation7], 128, 128, 8
        $region16: #{tpu_custom_call.1} parent=11 // pred_fallthru
          _
        // Predicated region
        $region17: #{tpu_custom_call.1} parent=11 // pred_check
          %p204 = pneg %p105
        $region18: #{tpu_custom_call.1} parent=11 // pred_check_branch
          %206 = sbr.rel (%p204) target = $region20
        $region19: #{tpu_custom_call.1} parent=11 // pred_region
          _
        $region20: #{tpu_custom_call.1} parent=11 // pred_fallthru
          _
        // Predicated region
        $region21: #{tpu_custom_call.1} parent=11 // pred_check
          %p207 = pneg %p126
        $region22: #{tpu_custom_call.1} parent=11 // pred_check_branch
          %209 = sbr.rel (%p207) target = $region24
        $region23: #{tpu_custom_call.1} parent=11 // pred_region
          %s211 = ssub.s32 2048, 2048
          %212 = vsyncadd [#allocation7], %s211
          %s213 = sshll.u32 [#allocation8], 4
          %s214 = int_to_ptr.vmem [resolvable:$true] %s213
          %219 = dma.hbm_to_vmem [thread:$0]  %s3, 2048, %s214, [#allocation7], 128, 128, 8
        $region24: #{tpu_custom_call.1} parent=11 // pred_fallthru
          _
        // Predicated region
        $region25: #{tpu_custom_call.1} parent=11 // pred_check
          %p220 = pneg %p147
        $region26: #{tpu_custom_call.1} parent=11 // pred_check_branch
          %222 = sbr.rel (%p220) target = $region28
        $region27: #{tpu_custom_call.1} parent=11 // pred_region
          _
        $region28: #{tpu_custom_call.1} parent=11 // pred_fallthru
          _
      $region12: #{tpu_custom_call.1} parent=5 // pred_fallthru
        _
      %p223 = scmp.lt.s32.totalorder %s18, 2
      // Predicated region
      $region29: #{tpu_custom_call.1} parent=5 // pred_check
        %p224 = pneg %p223
      $region30: #{tpu_custom_call.1} parent=5 // pred_check_branch
        %226 = sbr.rel (%p224) target = $region32
      $region31: #{tpu_custom_call.1} parent=5 // pred_region
        // Predicated region
        $region33: #{tpu_custom_call.1} parent=31 // pred_check
          %p227 = pneg %p52
        $region34: #{tpu_custom_call.1} parent=31 // pred_check_branch
          %229 = sbr.rel (%p227) target = $region36
        $region35: #{tpu_custom_call.1} parent=31 // pred_region
          %s230 = sand.u32 %s42, 1
          %s231 = scalar_lea.sflag [#allocation4], %s230
          %s232 = sand.u32 %s42, 1
          %s233 = smul.addr %s232, 8
          %s234 = scalar_lea.vmem [#allocation3], %s233
          %s236 = ssub.s32 128, 128
          %237 = vsyncadd %s231, %s236
          %s238 = sadd.s32 %s26, %s25
          %s239 = smul.addr %s238, 128
          %s240 = scalar_lea.hbm %s0, %s239
          %s242 = sshll.u32 %s234, 4
          %s243 = int_to_ptr.vmem [resolvable:$true] %s242
          %245 = dma.hbm_to_vmem [thread:$0]  %s240, 128, %s243, %s231
        $region36: #{tpu_custom_call.1} parent=31 // pred_fallthru
          _
      $region32: #{tpu_custom_call.1} parent=5 // pred_fallthru
        _
      %p246 = scmp.le.s32.totalorder 1, %s18
      %p247 = scmp.lt.s32.totalorder %s18, 3
      %p248 = pnand %p246, %p247
      %p249 = pneg %p248
      // Predicated region
      $region37: #{tpu_custom_call.1} parent=5 // pred_check
        _
      $region38: #{tpu_custom_call.1} parent=5 // pred_check_branch
        %251 = sbr.rel (%p248) target = $region40
      $region39: #{tpu_custom_call.1} parent=5 // pred_region
        %s252 = ssub.s32 %s18, 1
        %s253 = sand.u32 %s45, 1
        %s254 = scalar_lea.sflag [#allocation4], %s253
        %s255 = sand.u32 %s45, 1
        %s256 = smul.addr %s255, 8
        %s257 = scalar_lea.vmem [#allocation3], %s256
        // Predicated region
        $region41: #{tpu_custom_call.1} parent=39 // pred_check
          %p258 = pneg %p58
        $region42: #{tpu_custom_call.1} parent=39 // pred_check_branch
          %260 = sbr.rel (%p258) target = $region44
        $region43: #{tpu_custom_call.1} parent=39 // pred_region
          %261 = dma.done %s254, 128
        $region44: #{tpu_custom_call.1} parent=39 // pred_fallthru
          _
        // Predicated region
        $region45: #{tpu_custom_call.1} parent=39 // pred_check
          %p262 = pneg %p84
        $region46: #{tpu_custom_call.1} parent=39 // pred_check_branch
          %264 = sbr.rel (%p262) target = $region48
        $region47: #{tpu_custom_call.1} parent=39 // pred_region
          %265 = dma.done [#allocation7], 1024
        $region48: #{tpu_custom_call.1} parent=39 // pred_fallthru
          _
        // Predicated region
        $region49: #{tpu_custom_call.1} parent=39 // pred_check
          %p266 = pneg %p126
        $region50: #{tpu_custom_call.1} parent=39 // pred_check_branch
          %268 = sbr.rel (%p266) target = $region52
        $region51: #{tpu_custom_call.1} parent=39 // pred_region
          %269 = dma.done [#allocation7], 2048
        $region52: #{tpu_custom_call.1} parent=39 // pred_fallthru
          _
        %s270 = sand.u32 %s45, 1
        %s271 = scalar_lea.sflag [#allocation4], %s270
        %s272 = sand.u32 %s45, 1
        %s273 = smul.addr %s272, 8
        %s274 = scalar_lea.vmem [#allocation3], %s273
        %p275 = pneg %p58
        %p276 = pneg %p55
        %p277 = pneg %p84
        %p278 = pneg %p81
        %p279 = pneg %p105
        %p280 = pneg %p102
        %p281 = pneg %p126
        %p282 = pneg %p123
        %p283 = pneg %p147
        %p284 = pneg %p144
        %p285 = pneg %p173
        %p286 = pneg %p170
        %s287 = sand.u32 %s160, 1
        %s288 = scalar_lea.sflag [#allocation5], %s287
        %s289 = sand.u32 %s160, 1
        %s290 = smul.addr %s289, 8
        %s291 = scalar_lea.vmem [#allocation9], %s290
        %s292 = smul.u32 8, %s28
        %p293 = scmp.eq.s32.totalorder %s28, 0
        // Predicated region
        $region53: #{tpu_custom_call.1} parent=39 // pred_check
          %p294 = pneg %p293
        $region54: #{tpu_custom_call.1} parent=39 // pred_check_branch
          %296 = sbr.rel (%p294) target = $region56
        $region55: #{tpu_custom_call.1} parent=39 // pred_region
          %297 = vst [vmem:[#allocation2] sm:$0xff] 0.0
        $region56: #{tpu_custom_call.1} parent=39 // pred_fallthru
          _
        %v298 = vld [vmem:[#allocation2] sm:$0xff]
        %v299 = vld [vmem:[%s257] sm:$0xff]
        %v300 = vld [vmem:[#allocation6] sm:$0xff]
        %v301 = vld [vmem:[#allocation6 + $0x8] sm:$0xff]
        %v302 = vld [vmem:[#allocation6 + $0x10] sm:$0xff]
        %v303 = vld [vmem:[#allocation6 + $0x18] sm:$0xff]
        %v304 = vld [vmem:[#allocation6 + $0x20] sm:$0xff]
        %v305 = vld [vmem:[#allocation6 + $0x28] sm:$0xff]
        %v306 = vld [vmem:[#allocation6 + $0x30] sm:$0xff]
        %v307 = vld [vmem:[#allocation6 + $0x38] sm:$0xff]
        %vm308 = vcmask 523264
        %v310 = vsel %vm308, %v299, 0
        %312 = vmatprep.subr.mxu0 0.0
        %313 = vmatpush1.msra.mxu0 %v300
        %314 = vmatprep.subr.mxu0 0.0
        %315 = vmatpush1.msra.mxu0 %v301
        %316 = vmatprep.subr.mxu0 0.0
        %317 = vmatpush1.msra.mxu0 %v302
        %318 = vmatprep.subr.mxu0 0.0
        %319 = vmatpush1.msra.mxu0 %v303
        %320 = vmatprep.subr.mxu0 0.0
        %321 = vmatpush1.msra.mxu0 %v304
        %322 = vmatprep.subr.mxu0 0.0
        %323 = vmatpush1.msra.mxu0 %v305
        %324 = vmatprep.subr.mxu0 0.0
        %325 = vmatpush1.msra.mxu0 %v306
        %326 = vmatprep.subr.mxu0 0.0
        %327 = vmatpush1.msra.mxu0 %v307
        %328 = vmatprep.subr.mxu0 0.0
        %329 = vmatpush1.msra.mxu0 0.0
        %330 = vmatprep.subr.mxu0 0.0
        %331 = vmatpush1.msra.mxu0 0.0
        %332 = vmatprep.subr.mxu0 0.0
        %333 = vmatpush1.msra.mxu0 0.0
        %334 = vmatprep.subr.mxu0 0.0
        %335 = vmatpush1.msra.mxu0 0.0
        %336 = vmatprep.subr.mxu0 0.0
        %337 = vmatpush1.msra.mxu0 0.0
        %338 = vmatprep.subr.mxu0 0.0
        %339 = vmatpush1.msra.mxu0 0.0
        %340 = vmatprep.subr.mxu0 0.0
        %341 = vmatpush1.msra.mxu0 0.0
        %342 = vmatprep.subr.mxu0 0.0
        %343 = vmatpush1.msra.mxu0 0.0
        %344 = vmatprep.subr.mxu0 0.0
        %345 = vmatpush1.msra.mxu0 0.0
        %346 = vmatprep.subr.mxu0 0.0
        %347 = vmatpush1.msra.mxu0 0.0
        %348 = vmatprep.subr.mxu0 0.0
        %349 = vmatpush1.msra.mxu0 0.0
        %350 = vmatprep.subr.mxu0 0.0
        %351 = vmatpush1.msra.mxu0 0.0
        %352 = vmatprep.subr.mxu0 0.0
        %353 = vmatpush1.msra.mxu0 0.0
        %354 = vmatprep.subr.mxu0 0.0
        %355 = vmatpush1.msra.mxu0 0.0
        %356 = vmatprep.subr.mxu0 0.0
        %357 = vmatpush1.msra.mxu0 0.0
        %358 = vmatprep.subr.mxu0 0.0
        %359 = vmatpush1.msra.mxu0 0.0
        %360 = vmatprep.subr.mxu0 0.0
        %361 = vmatpush1.msra.mxu0 0.0
        %362 = vmatprep.subr.mxu0 0.0
        %363 = vmatpush1.msra.mxu0 0.0
        %364 = vmatprep.subr.mxu0 0.0
        %365 = vmatpush1.msra.mxu0 0.0
        %366 = vmatprep.subr.mxu0 0.0
        %367 = vmatpush1.msra.mxu0 0.0
        %368 = vmatprep.subr.mxu0 0.0
        %369 = vmatpush1.msra.mxu0 0.0
        %370 = vmatprep.subr.mxu0 0.0
        %371 = vmatpush1.msra.mxu0 0.0
        %372 = vmatprep.subr.mxu0 0.0
        %373 = vmatpush1.msra.mxu0 0.0
        %374 = vmatprep.subr.mxu0 0.0
        %375 = vmatpush1.msra.mxu0 0.0
        %376 = vmatprep.mubr.f32.mxu0 0.0
        %377 = vmatmul.mubr.f32.gmra.mrb[0].mxu0 %v310
        %v378 = vpop.f32.mrb[0].mxu0
        %v379 = vadd.f32 0.0, %v378
        %v380 = vpop.f32.mrb[0].mxu0
        %381 = vdwg.mxu0
        %v382 = vadd.f32 %v298, %v379
        %383 = vst [vmem:[#allocation2] sm:$0xff] %v382
        // Predicated region
        $region57: #{tpu_custom_call.1} parent=39 // pred_check
          %p384 = pneg %p293
        $region58: #{tpu_custom_call.1} parent=39 // pred_check_branch
          %386 = sbr.rel (%p384) target = $region60
        $region59: #{tpu_custom_call.1} parent=39 // pred_region
          %v387 = vld [vmem:[#allocation2] sm:$0xff]
          %v388 = vld [vmem:[%s2] sm:$0x1]
          %v390 = vlaneseq
          %v391 = vshrl.u32 %v390, 7
          %v392 = vsub.s32 0, %v391
          %v393 = vrot.slane %v388, %v392
          %v395 = vadd.f32 %v387, %v393
          %v396 = vmax.f32 %v395, 0.0
          %v397 = vld [vmem:[#allocation8] sm:$0xff]
          %v398 = vld [vmem:[#allocation8 + $0x8] sm:$0xff]
          %v399 = vld [vmem:[#allocation8 + $0x10] sm:$0xff]
          %v400 = vld [vmem:[#allocation8 + $0x18] sm:$0xff]
          %v401 = vld [vmem:[#allocation8 + $0x20] sm:$0xff]
          %v402 = vld [vmem:[#allocation8 + $0x28] sm:$0xff]
          %v403 = vld [vmem:[#allocation8 + $0x30] sm:$0xff]
          %v404 = vld [vmem:[#allocation8 + $0x38] sm:$0xff]
          %v405 = vld [vmem:[#allocation8 + $0x40] sm:$0xff]
          %v406 = vld [vmem:[#allocation8 + $0x48] sm:$0xff]
          %v407 = vld [vmem:[#allocation8 + $0x50] sm:$0xff]
          %v408 = vld [vmem:[#allocation8 + $0x58] sm:$0xff]
          %v409 = vld [vmem:[#allocation8 + $0x60] sm:$0xff]
          %v410 = vld [vmem:[#allocation8 + $0x68] sm:$0xff]
          %v411 = vld [vmem:[#allocation8 + $0x70] sm:$0xff]
          %v412 = vld [vmem:[#allocation8 + $0x78] sm:$0xff]
          %v413 = vld [vmem:[%s4] sm:$0x1]
          %v415 = vlaneseq
          %v416 = vshrl.u32 %v415, 7
          %v417 = vsub.s32 0, %v416
          %v418 = vrot.slane %v413, %v417
          %420 = vmatprep.subr.mxu0 0.0
          %421 = vmatpush1.msra.mxu0 %v397
          %422 = vmatprep.subr.mxu0 0.0
          %423 = vmatpush1.msra.mxu0 %v398
          %424 = vmatprep.subr.mxu0 0.0
          %425 = vmatpush1.msra.mxu0 %v399
          %426 = vmatprep.subr.mxu0 0.0
          %427 = vmatpush1.msra.mxu0 %v400
          %428 = vmatprep.subr.mxu0 0.0
          %429 = vmatpush1.msra.mxu0 %v401
          %430 = vmatprep.subr.mxu0 0.0
          %431 = vmatpush1.msra.mxu0 %v402
          %432 = vmatprep.subr.mxu0 0.0
          %433 = vmatpush1.msra.mxu0 %v403
          %434 = vmatprep.subr.mxu0 0.0
          %435 = vmatpush1.msra.mxu0 %v404
          %436 = vmatprep.subr.mxu0 0.0
          %437 = vmatpush1.msra.mxu0 %v405
          %438 = vmatprep.subr.mxu0 0.0
          %439 = vmatpush1.msra.mxu0 %v406
          %440 = vmatprep.subr.mxu0 0.0
          %441 = vmatpush1.msra.mxu0 %v407
          %442 = vmatprep.subr.mxu0 0.0
          %443 = vmatpush1.msra.mxu0 %v408
          %444 = vmatprep.subr.mxu0 0.0
          %445 = vmatpush1.msra.mxu0 %v409
          %446 = vmatprep.subr.mxu0 0.0
          %447 = vmatpush1.msra.mxu0 %v410
          %448 = vmatprep.subr.mxu0 0.0
          %449 = vmatpush1.msra.mxu0 %v411
          %450 = vmatprep.subr.mxu0 0.0
          %451 = vmatpush1.msra.mxu0 %v412
          %452 = vmatprep.subr.mxu0 0.0
          %453 = vmatpush1.msra.mxu0 0.0
          %454 = vmatprep.subr.mxu0 0.0
          %455 = vmatpush1.msra.mxu0 0.0
          %456 = vmatprep.subr.mxu0 0.0
          %457 = vmatpush1.msra.mxu0 0.0
          %458 = vmatprep.subr.mxu0 0.0
          %459 = vmatpush1.msra.mxu0 0.0
          %460 = vmatprep.subr.mxu0 0.0
          %461 = vmatpush1.msra.mxu0 0.0
          %462 = vmatprep.subr.mxu0 0.0
          %463 = vmatpush1.msra.mxu0 0.0
          %464 = vmatprep.subr.mxu0 0.0
          %465 = vmatpush1.msra.mxu0 0.0
          %466 = vmatprep.subr.mxu0 0.0
          %467 = vmatpush1.msra.mxu0 0.0
          %468 = vmatprep.subr.mxu0 0.0
          %469 = vmatpush1.msra.mxu0 0.0
          %470 = vmatprep.subr.mxu0 0.0
          %471 = vmatpush1.msra.mxu0 0.0
          %472 = vmatprep.subr.mxu0 0.0
          %473 = vmatpush1.msra.mxu0 0.0
          %474 = vmatprep.subr.mxu0 0.0
          %475 = vmatpush1.msra.mxu0 0.0
          %476 = vmatprep.subr.mxu0 0.0
          %477 = vmatpush1.msra.mxu0 0.0
          %478 = vmatprep.subr.mxu0 0.0
          %479 = vmatpush1.msra.mxu0 0.0
          %480 = vmatprep.subr.mxu0 0.0
          %481 = vmatpush1.msra.mxu0 0.0
          %482 = vmatprep.subr.mxu0 0.0
          %483 = vmatpush1.msra.mxu0 0.0
          %484 = vmatprep.mubr.f32.mxu0 0.0
          %485 = vmatmul.mubr.f32.gmra.mrb[0].mxu0 %v396
          %v486 = vpop.f32.mrb[0].mxu0
          %v487 = vadd.f32 %v418, %v486
          %v488 = vpop.f32.mrb[0].mxu0
          %489 = vdwg.mxu0
          %v490 = vmul.f32 %v487, %v487
          %491 = vadd.xlane.f32.xlu0 %v490
          %v492 = vpop.xlane.xlu0 %491
          %v493 = vrsqrt.pop %v492
          %v494 = vmul.f32 %v487, %v493
          %495 = vst [vmem:[%s291] sm:$0xff] %v494
        $region60: #{tpu_custom_call.1} parent=39 // pred_fallthru
          _
        %s496 = sand.u32 %s160, 1
        %s497 = scalar_lea.sflag [#allocation5], %s496
        %s498 = sand.u32 %s160, 1
        %s499 = smul.addr %s498, 8
        %s500 = scalar_lea.vmem [#allocation9], %s499
        // Predicated region
        $region61: #{tpu_custom_call.1} parent=39 // pred_check
          %p501 = pneg %p170
        $region62: #{tpu_custom_call.1} parent=39 // pred_check_branch
          %503 = sbr.rel (%p501) target = $region64
        $region63: #{tpu_custom_call.1} parent=39 // pred_region
          %s505 = ssub.s32 128, 128
          %506 = vsyncadd %s497, %s505
          %s507 = smul.addr %s27, 128
          %s508 = scalar_lea.hbm %s5, %s507
          %s510 = sshll.u32 %s500, 4
          %s511 = int_to_ptr.vmem [resolvable:$true] %s510
          %513 = dma.vmem_to_hbm [thread:$0]  %s511, 128, %s508, %s497
        $region64: #{tpu_custom_call.1} parent=39 // pred_fallthru
          _
      $region40: #{tpu_custom_call.1} parent=5 // pred_fallthru
        _
      %p514 = scmp.le.s32.totalorder 2, %s18
      // Predicated region
      $region65: #{tpu_custom_call.1} parent=5 // pred_check
        %p515 = pneg %p514
      $region66: #{tpu_custom_call.1} parent=5 // pred_check_branch
        %517 = sbr.rel (%p515) target = $region68
      $region67: #{tpu_custom_call.1} parent=5 // pred_region
        %s518 = ssub.s32 %s18, 2
        // Predicated region
        $region69: #{tpu_custom_call.1} parent=67 // pred_check
          %p519 = pneg %p176
        $region70: #{tpu_custom_call.1} parent=67 // pred_check_branch
          %521 = sbr.rel (%p519) target = $region72
        $region71: #{tpu_custom_call.1} parent=67 // pred_region
          %s522 = sand.u32 %s161, 1
          %s523 = scalar_lea.sflag [#allocation5], %s522
          %s524 = sand.u32 %s161, 1
          %s525 = smul.addr %s524, 8
          %s526 = scalar_lea.vmem [#allocation9], %s525
          %527 = dma.done %s523, 128
        $region72: #{tpu_custom_call.1} parent=67 // pred_fallthru
          _
      $region68: #{tpu_custom_call.1} parent=5 // pred_fallthru
        _
    $region6: #{tpu_custom_call.1} parent=1 // loop_footer
      %s22 = sadd.s32 1, %s18
    $region7: #{tpu_custom_call.1} parent=1 // loop_footer_branch
      %17 = sbr.rel target = $region3
    $region8: #{tpu_custom_call.1} parent=1 // loop_exit
      _
    %528 = vsyncpa [#allocation4], 1
    %s529 = scalar_lea.sflag [#allocation4], 1
    %530 = vsyncpa %s529, 1
    %531 = vsyncpa [#allocation7], 1
    %532 = vsyncpa [#allocation5], 1
    %s533 = scalar_lea.sflag [#allocation5], 1
    %534 = vsyncpa %s533, 1

</llo_original>
